<compile_context>
chip_gen: v5e
topology: v5e:2x2
jax: 0.10.0
libtpu: 0.0.40
codegen_flags: <defaults>
</compile_context>

<pallas_src>
import functools

import jax
import jax.numpy as jnp
from jax.experimental import pallas as pl
from jax.experimental.pallas import tpu as pltpu


def _round_up(x, m):
    return -(-x // m) * m


def _causal_conv1d_kernel(halo_ref, x_ref, w_ref, b_ref, o_ref, xf_ref, *,
                          dilation, pad_left, pad_a, k_taps, t_tile):
    """One (batch, time-tile) grid step.

    halo_ref: (1, 1, C_in, max(pad_left, 1)) causal halo (zeros on tile 0)
    x_ref:    (1, C_in, t_tile)              current time tile of x
    w_ref:    (K, C_out, C_in)               tap-major weights (resident)
    b_ref:    (C_out, 1)                     bias
    o_ref:    (1, C_out, t_tile)             output tile
    xf_ref:   (C_in, pad_a + t_tile) VMEM scratch; the halo is placed at
              [pad_a - pad_left, pad_a), the tile at [pad_a, pad_a + t_tile).
    """
    # Assemble the halo-extended tile in VMEM (the wide store is 128-aligned).
    xf_ref[:, pad_a:] = x_ref[0]
    if pad_left > 0:
        xf_ref[:, pad_a - pad_left:pad_a] = halo_ref[0, 0]

    base = pad_a - pad_left
    c_out = o_ref.shape[1]
    acc = jnp.zeros((c_out, t_tile), jnp.float32)
    # Dilated causal conv = K shifted matmuls on the MXU; each tap uses a
    # contiguous (C_out, C_in) weight tile, accumulation in f32.
    for k in range(k_taps):
        off = base + k * dilation
        acc = acc + jnp.dot(w_ref[k], xf_ref[:, off:off + t_tile],
                            preferred_element_type=jnp.float32)
    acc = acc + b_ref[...]                 # (C_out, 1) broadcasts over time
    o_ref[0] = acc.astype(o_ref.dtype)     # full lane-dense tile store


def causal_conv1d(x, weight, bias, *, dilation=1, time_tile=512):
    """Causal dilated Conv1d. x: (B, C_in, T) -> (B, C_out, T)."""
    B, C_in, T = x.shape
    C_out, C_in_w, K = weight.shape
    assert C_in_w == C_in, "weight/in_channels mismatch"
    pad_left = (K - 1) * dilation

    # ---- time tiling: lane-dense tiles (multiple of 128), VMEM-bounded ----
    tile = max(128, (time_tile // 128) * 128)
    if pad_left > tile:                      # halo must fit in one previous tile
        tile = _round_up(pad_left, 128)
    if T <= tile:
        t_tile, t_pad = T, T                 # single tile: block == full time dim
    else:
        t_tile = tile
        t_pad = _round_up(T, tile)           # right-pad; tail outputs sliced off
    num_tiles = t_pad // t_tile

    x_p = x if t_pad == T else jnp.pad(x, ((0, 0), (0, 0), (0, t_pad - T)))

    # ---- tiny per-tile causal halo instead of a full left-padded copy of x ----
    hw = max(pad_left, 1)
    if pad_left == 0 or num_tiles == 1:
        halo = jnp.zeros((B, num_tiles, C_in, hw), x.dtype)
    else:
        x_tiles = x_p.reshape(B, C_in, num_tiles, t_tile)
        tails = x_tiles[:, :, :num_tiles - 1, t_tile - pad_left:]
        halo = jnp.concatenate(
            [jnp.zeros((B, C_in, 1, pad_left), x.dtype), tails], axis=2)
        halo = jnp.transpose(halo, (0, 2, 1, 3))    # (B, num_tiles, C_in, pad)

    # ---- weight re-layout (wrapper-side plumbing is free) ----
    w_t = jnp.transpose(weight, (2, 0, 1))          # (K, C_out, C_in)
    bias2d = bias.reshape(C_out, 1)

    pad_a = _round_up(pad_left, 128) if pad_left > 0 else 0

    kernel = functools.partial(
        _causal_conv1d_kernel,
        dilation=dilation, pad_left=pad_left, pad_a=pad_a,
        k_taps=K, t_tile=t_tile)

    out = pl.pallas_call(
        kernel,
        out_shape=jax.ShapeDtypeStruct((B, C_out, t_pad), x.dtype),
        grid=(B, num_tiles),
        in_specs=[
            pl.BlockSpec((1, 1, C_in, hw), lambda b, t: (b, t, 0, 0)),   # halo
            pl.BlockSpec((1, C_in, t_tile), lambda b, t: (b, 0, t)),     # x tile
            pl.BlockSpec((K, C_out, C_in), lambda b, t: (0, 0, 0)),      # weights
            pl.BlockSpec((C_out, 1), lambda b, t: (0, 0)),               # bias
        ],
        out_specs=pl.BlockSpec((1, C_out, t_tile), lambda b, t: (b, 0, t)),
        scratch_shapes=[pltpu.VMEM((C_in, pad_a + t_tile), x.dtype)],
        compiler_params=pltpu.CompilerParams(
            dimension_semantics=("parallel", "parallel"),
            vmem_limit_bytes=32 * 1024 * 1024),
    )(halo, x_p, w_t, bias2d)

    return out if t_pad == T else out[:, :, :T]


def _reference_causal_conv1d(x, weight, bias, *, dilation=1):
    """Pure-JAX reference (mirrors PyTorch: pad both sides, conv, slice to T)."""
    K = weight.shape[2]
    T = x.shape[2]
    p = (K - 1) * dilation
    xpad = jnp.pad(x, ((0, 0), (0, 0), (p, p)))
    y = jax.lax.conv_general_dilated(
        xpad, weight,
        window_strides=(1,),
        padding="VALID",
        rhs_dilation=(dilation,),
        dimension_numbers=("NCH", "OIH", "NCH"),
        precision=jax.lax.Precision.HIGHEST,
    )
    y = y + bias.reshape(1, -1, 1)
    return y[:, :, :T]


def _run_case(B, C_in, C_out, T, K, dilation, time_tile, key):
    kx, kw, kb = jax.random.split(key, 3)
    x = jax.random.normal(kx, (B, C_in, T), dtype=jnp.float32)
    fan_in = C_in * K
    bound = 1.0 / (fan_in ** 0.5)
    weight = jax.random.uniform(kw, (C_out, C_in, K), jnp.float32, -bound, bound)
    bias = jax.random.uniform(kb, (C_out,), jnp.float32, -bound, bound)

    y = causal_conv1d(x, weight, bias, dilation=dilation, time_tile=time_tile)
    y = jax.block_until_ready(y)
    y_ref = _reference_causal_conv1d(x, weight, bias, dilation=dilation)
    assert y.shape == (B, C_out, T)
    assert jnp.allclose(y, y_ref, atol=1e-4, rtol=1e-4), (
        f"mismatch B={B} C_in={C_in} C_out={C_out} T={T} K={K} d={dilation}")


if __name__ == "__main__":
    key = jax.random.PRNGKey(0)
    k0, k1, k2 = jax.random.split(key, 3)

    # Module-consistent small config: CausalConv1d(4, 6, 3, dilation=2), single tile.
    _run_case(B=2, C_in=4, C_out=6, T=16, K=3, dilation=2, time_tile=512, key=k0)
    # Multi-tile path (4 lane-dense tiles of 128) exercising the causal halo.
    _run_case(B=2, C_in=4, C_out=6, T=512, K=3, dilation=2, time_tile=128, key=k1)
    # Ragged T (right-padded to a tile multiple) with a larger dilation.
    _run_case(B=2, C_in=4, C_out=6, T=300, K=3, dilation=4, time_tile=128, key=k2)

    print("KERNEL_OK")
</pallas_src>

<mosaic_0001>
module attributes {stable_mosaic.version = 11 : i64} {
  func.func @_causal_conv1d_kernel(%arg0: i32, %arg1: i32, %arg2: memref<1x1x4x4xf32, #tpu.memory_space<vmem>>, %arg3: memref<1x4x16xf32, #tpu.memory_space<vmem>>, %arg4: memref<3x6x4xf32, #tpu.memory_space<vmem>>, %arg5: memref<6x1xf32, #tpu.memory_space<vmem>>, %arg6: memref<1x6x16xf32, #tpu.memory_space<vmem>>, %arg7: memref<4x144xf32, #tpu.memory_space<vmem>>) attributes {dimension_semantics = [#tpu.dimension_semantics<parallel>, #tpu.dimension_semantics<parallel>], iteration_bounds = array<i64: 2, 1>, scalar_prefetch = 0 : i64, scratch_operands = 1 : i64, tpu.core_type = #tpu.core_type<tc>, window_params = [{transform_indices = @transform_0, window_bounds = array<i64: 1, 1, 4, 4>}, {transform_indices = @transform_1, window_bounds = array<i64: 1, 4, 16>}, {pipeline_mode = #tpu.pipeline_mode<synchronous>, transform_indices = @transform_2, window_bounds = array<i64: 3, 6, 4>}, {pipeline_mode = #tpu.pipeline_mode<synchronous>, transform_indices = @transform_3, window_bounds = array<i64: 6, 1>}, {transform_indices = @transform_4, window_bounds = array<i64: 1, 6, 16>}]} {
    %c0 = arith.constant 0 : index
    %c0_0 = arith.constant 0 : index
    %c0_1 = arith.constant 0 : index
    %0 = vector.load %arg3[%c0, %c0_0, %c0_1] : memref<1x4x16xf32, #tpu.memory_space<vmem>>, vector<1x4x16xf32>
    %1 = vector.shape_cast %0 : vector<1x4x16xf32> to vector<4x16xf32>
    %c0_2 = arith.constant 0 : index
    %c128 = arith.constant 128 : index
    %2 = vector.load %arg7[%c0_2, %c128] : memref<4x144xf32, #tpu.memory_space<vmem>>, vector<4x16xf32>
    tpu.vector_store %arg7[%c0_2, %c128], %1 {strides = array<i32>} : memref<4x144xf32, #tpu.memory_space<vmem>>, vector<4x16xf32>,
    %c0_3 = arith.constant 0 : index
    %c0_4 = arith.constant 0 : index
    %c0_5 = arith.constant 0 : index
    %c0_6 = arith.constant 0 : index
    %3 = vector.load %arg2[%c0_3, %c0_4, %c0_5, %c0_6] : memref<1x1x4x4xf32, #tpu.memory_space<vmem>>, vector<1x1x4x4xf32>
    %4 = vector.shape_cast %3 : vector<1x1x4x4xf32> to vector<4x4xf32>
    %c0_7 = arith.constant 0 : index
    %c124 = arith.constant 124 : index
    %5 = vector.load %arg7[%c0_7, %c124] : memref<4x144xf32, #tpu.memory_space<vmem>>, vector<4x4xf32>
    tpu.vector_store %arg7[%c0_7, %c124], %4 {strides = array<i32>} : memref<4x144xf32, #tpu.memory_space<vmem>>, vector<4x4xf32>,
    %cst = arith.constant 0.000000e+00 : f32
    %6 = vector.broadcast %cst : f32 to vector<6x16xf32>
    %c0_8 = arith.constant 0 : index
    %c0_9 = arith.constant 0 : index
    %c0_10 = arith.constant 0 : index
    %7 = vector.load %arg4[%c0_8, %c0_9, %c0_10] : memref<3x6x4xf32, #tpu.memory_space<vmem>>, vector<1x6x4xf32>
    %8 = vector.shape_cast %7 : vector<1x6x4xf32> to vector<6x4xf32>
    %c0_11 = arith.constant 0 : index
    %c124_12 = arith.constant 124 : index
    %9 = vector.load %arg7[%c0_11, %c124_12] : memref<4x144xf32, #tpu.memory_space<vmem>>, vector<4x16xf32>
    %cst_13 = arith.constant dense<0.000000e+00> : vector<6x16xf32>
    %10 = tpu.matmul %8, %9, %cst_13 {dimension_numbers = #tpu.dot_dimension_numbers<[1], [0], [0], [1], [0, 0, 1, 1], [], []>} : vector<6x4xf32>, vector<4x16xf32>, vector<6x16xf32> -> vector<6x16xf32>
    %11 = arith.addf %6, %10 : vector<6x16xf32>
    %c1 = arith.constant 1 : index
    %c0_14 = arith.constant 0 : index
    %c0_15 = arith.constant 0 : index
    %12 = vector.load %arg4[%c1, %c0_14, %c0_15] : memref<3x6x4xf32, #tpu.memory_space<vmem>>, vector<1x6x4xf32>
    %13 = vector.shape_cast %12 : vector<1x6x4xf32> to vector<6x4xf32>
    %c0_16 = arith.constant 0 : index
    %c126 = arith.constant 126 : index
    %14 = vector.load %arg7[%c0_16, %c126] : memref<4x144xf32, #tpu.memory_space<vmem>>, vector<4x16xf32>
    %cst_17 = arith.constant dense<0.000000e+00> : vector<6x16xf32>
    %15 = tpu.matmul %13, %14, %cst_17 {dimension_numbers = #tpu.dot_dimension_numbers<[1], [0], [0], [1], [0, 0, 1, 1], [], []>} : vector<6x4xf32>, vector<4x16xf32>, vector<6x16xf32> -> vector<6x16xf32>
    %16 = arith.addf %11, %15 : vector<6x16xf32>
    %c2 = arith.constant 2 : index
    %c0_18 = arith.constant 0 : index
    %c0_19 = arith.constant 0 : index
    %17 = vector.load %arg4[%c2, %c0_18, %c0_19] : memref<3x6x4xf32, #tpu.memory_space<vmem>>, vector<1x6x4xf32>
    %18 = vector.shape_cast %17 : vector<1x6x4xf32> to vector<6x4xf32>
    %c0_20 = arith.constant 0 : index
    %c128_21 = arith.constant 128 : index
    %19 = vector.load %arg7[%c0_20, %c128_21] : memref<4x144xf32, #tpu.memory_space<vmem>>, vector<4x16xf32>
    %cst_22 = arith.constant dense<0.000000e+00> : vector<6x16xf32>
    %20 = tpu.matmul %18, %19, %cst_22 {dimension_numbers = #tpu.dot_dimension_numbers<[1], [0], [0], [1], [0, 0, 1, 1], [], []>} : vector<6x4xf32>, vector<4x16xf32>, vector<6x16xf32> -> vector<6x16xf32>
    %21 = arith.addf %16, %20 : vector<6x16xf32>
    %c0_23 = arith.constant 0 : index
    %c0_24 = arith.constant 0 : index
    %22 = vector.load %arg5[%c0_23, %c0_24] : memref<6x1xf32, #tpu.memory_space<vmem>>, vector<6x1xf32>
    %23 = vector.broadcast %22 : vector<6x1xf32> to vector<6x16xf32>
    %24 = arith.addf %21, %23 : vector<6x16xf32>
    %c0_25 = arith.constant 0 : index
    %c0_26 = arith.constant 0 : index
    %c0_27 = arith.constant 0 : index
    %25 = vector.load %arg6[%c0_25, %c0_26, %c0_27] : memref<1x6x16xf32, #tpu.memory_space<vmem>>, vector<1x6x16xf32>
    %26 = vector.shape_cast %25 : vector<1x6x16xf32> to vector<6x16xf32>
    %27 = vector.shape_cast %24 : vector<6x16xf32> to vector<1x6x16xf32>
    tpu.vector_store %arg6[%c0_25, %c0_26, %c0_27], %27 {strides = array<i32>} : memref<1x6x16xf32, #tpu.memory_space<vmem>>, vector<1x6x16xf32>,
    return
  }
  func.func @transform_0(%arg0: i32, %arg1: i32) -> (i32, i32, i32, i32) {
    %c0_i32 = arith.constant 0 : i32
    %c0_i32_0 = arith.constant 0 : i32
    %c0_i32_1 = arith.constant 0 : i32
    return %arg0, %arg1, %c0_i32, %c0_i32_0 : i32, i32, i32, i32
  }
  func.func @transform_1(%arg0: i32, %arg1: i32) -> (i32, i32, i32) {
    %c0_i32 = arith.constant 0 : i32
    %c0_i32_0 = arith.constant 0 : i32
    return %arg0, %c0_i32, %arg1 : i32, i32, i32
  }
  func.func @transform_2(%arg0: i32, %arg1: i32) -> (i32, i32, i32) {
    %c0_i32 = arith.constant 0 : i32
    %c0_i32_0 = arith.constant 0 : i32
    %c0_i32_1 = arith.constant 0 : i32
    %c0_i32_2 = arith.constant 0 : i32
    return %c0_i32, %c0_i32_0, %c0_i32_1 : i32, i32, i32
  }
  func.func @transform_3(%arg0: i32, %arg1: i32) -> (i32, i32) {
    %c0_i32 = arith.constant 0 : i32
    %c0_i32_0 = arith.constant 0 : i32
    %c0_i32_1 = arith.constant 0 : i32
    return %c0_i32, %c0_i32_0 : i32, i32
  }
  func.func @transform_4(%arg0: i32, %arg1: i32) -> (i32, i32, i32) {
    %c0_i32 = arith.constant 0 : i32
    %c0_i32_0 = arith.constant 0 : i32
    return %arg0, %c0_i32, %arg1 : i32, i32, i32
  }
}

</mosaic_0001>

<llo_original>
// kernel: tpu_custom_call.1
$region0: #{tpu_custom_call.1}
  #allocation0 [shape = 'u32[]', space=smem, size = 0x4, offset = 0x4, fixed_abs, tag = 'smem constant byte address 0x4 - core index']
  #allocation1 [shape = 'u32[72,128]{1,0:T(1,128)}', space=vmem, size = 0x9000, scoped, tag = 'internal scratch']
  #allocation2 [shape = 'f32[4,144]{1,0:T(4,128)}', space=vmem, size = 0x1000, scoped, tag = 'scratch operand']
  %s0 = inlined_call_operand.vmem [shape: f32[2,1,4,4], index: 0, kind: input, shape index: {}]
  %s1 = inlined_call_operand.vmem [shape: f32[2,4,16], index: 1, kind: input, shape index: {}]
  %s2 = inlined_call_operand.vmem [shape: f32[3,6,4], index: 2, kind: input, shape index: {}]
  %s3 = inlined_call_operand.vmem [shape: f32[6,1], index: 3, kind: input, shape index: {}]
  %s4 = inlined_call_operand.vmem [shape: f32[2,6,16], index: 4, kind: output, shape index: {}]
  %s5 = sld [smem:[#allocation0]]
  $region49: #{tpu_custom_call.1} parent=0
    _
  %s7 = ssub.s32 1, %s5
  %s8 = scalar_select 0, %s7, %s5
  loop: start=0, step=1, limit=4
  $region2: #{tpu_custom_call.1} parent=0 // loop_pre_header
    _
  $region3: #{tpu_custom_call.1} parent=0 // loop_header
    %s10 = sphi 0, %s14
    %p11 = scmp.ge.s32.totalorder %s10, 4
    %s17 = sphi 0, %s29
    %s18 = sphi 0, %s25
    %s19 = sphi 0, %s17
    %s20 = sphi 0, %s18
    %s21 = sphi 0, %s19
    %s22 = sphi 0, %s20
    %s34 = sphi 0, %s36
    %s37 = sphi 0, %s34
    %s38 = sphi 0, %s37
    %s54 = sphi 0, %s38
    %s62 = sphi 0, %s64
    %s65 = sphi 0, %s62
    %s66 = sphi 0, %s65
    %s82 = sphi 0, %s66
    %s86 = sphi 0, %s86
    %s88 = sphi 0, %s86
    %s89 = sphi 0, %s88
    %s103 = sphi 0, %s89
    %s107 = sphi 0, %s107
    %s109 = sphi 0, %s107
    %s110 = sphi 0, %s109
    %s124 = sphi 0, %s110
    %s132 = sphi 0, %s134
    %s135 = sphi 0, %s132
    %s136 = sphi 0, %s135
    %s152 = sphi 0, %s136
  $region4: #{tpu_custom_call.1} parent=0 // loop_header_branch
    %13 = sbr.rel (%p11) target = $region8
  $region5: #{tpu_custom_call.1} parent=0 // loop_body
    %s15 = ssub.s32 %s10, 1
    %s16 = ssub.s32 %s10, 2
    %s23 = sadd.s32 1, %s18
    %p24 = scmp.ge.s32.totalorder %s23, 1
    %s25 = scalar_select %p24, 0, %s23
    %s26 = sadd.s32 1, %s17
    %s27 = scalar_select %p24, %s26, %s17
    %p28 = scmp.ge.s32.totalorder %s27, 2
    %s29 = scalar_select %p28, 0, %s27
    %s30 = ssub.s32 %s17, %s29
    %s31 = ssub.s32 %s18, %s25
    %s32 = sor.u32 %s30, %s31
    %p33 = scmp.eq.s32.totalorder %s32, 0
    %s35 = sadd.s32 %s34, 1
    %s36 = scalar_select %p33, %s34, %s35
    %p39 = pneg %p33
    %p40 = scmp.eq.s32.totalorder %s10, 1
    %p41 = por %p39, %p40
    %p42 = scmp.ne.s32.totalorder %s34, %s37
    %p43 = scmp.eq.s32.totalorder %s10, 0
    %p44 = por %p42, %p43
    %p45 = scmp.ne.s32.totalorder %s34, %s37
    %p46 = scmp.eq.s32.totalorder %s15, 1
    %p47 = por %p45, %p46
    %p48 = scmp.ne.s32.totalorder %s37, %s38
    %p49 = scmp.eq.s32.totalorder %s15, 0
    %p50 = por %p48, %p49
    %p51 = scmp.ne.s32.totalorder %s37, %s38
    %p52 = scmp.eq.s32.totalorder %s16, 1
    %p53 = por %p51, %p52
    %p55 = scmp.ne.s32.totalorder %s38, %s54
    %p56 = scmp.eq.s32.totalorder %s16, 0
    %p57 = por %p55, %p56
    %s58 = ssub.s32 %s17, %s29
    %s59 = ssub.s32 %s18, %s25
    %s60 = sor.u32 %s58, %s59
    %p61 = scmp.eq.s32.totalorder %s60, 0
    %s63 = sadd.s32 %s62, 1
    %s64 = scalar_select %p61, %s62, %s63
    %p67 = pneg %p61
    %p68 = scmp.eq.s32.totalorder %s10, 1
    %p69 = por %p67, %p68
    %p70 = scmp.ne.s32.totalorder %s62, %s65
    %p71 = scmp.eq.s32.totalorder %s10, 0
    %p72 = por %p70, %p71
    %p73 = scmp.ne.s32.totalorder %s62, %s65
    %p74 = scmp.eq.s32.totalorder %s15, 1
    %p75 = por %p73, %p74
    %p76 = scmp.ne.s32.totalorder %s65, %s66
    %p77 = scmp.eq.s32.totalorder %s15, 0
    %p78 = por %p76, %p77
    %p79 = scmp.ne.s32.totalorder %s65, %s66
    %p80 = scmp.eq.s32.totalorder %s16, 1
    %p81 = por %p79, %p80
    %p83 = scmp.ne.s32.totalorder %s66, %s82
    %p84 = scmp.eq.s32.totalorder %s16, 0
    %p85 = por %p83, %p84
    %s87 = sadd.s32 %s86, 1
    %p90 = scmp.eq.s32.totalorder %s10, 1
    %p91 = scmp.ne.s32.totalorder %s86, %s88
    %p92 = scmp.eq.s32.totalorder %s10, 0
    %p93 = por %p91, %p92
    %p94 = scmp.ne.s32.totalorder %s86, %s88
    %p95 = scmp.eq.s32.totalorder %s15, 1
    %p96 = por %p94, %p95
    %p97 = scmp.ne.s32.totalorder %s88, %s89
    %p98 = scmp.eq.s32.totalorder %s15, 0
    %p99 = por %p97, %p98
    %p100 = scmp.ne.s32.totalorder %s88, %s89
    %p101 = scmp.eq.s32.totalorder %s16, 1
    %p102 = por %p100, %p101
    %p104 = scmp.ne.s32.totalorder %s89, %s103
    %p105 = scmp.eq.s32.totalorder %s16, 0
    %p106 = por %p104, %p105
    %s108 = sadd.s32 %s107, 1
    %p111 = scmp.eq.s32.totalorder %s10, 1
    %p112 = scmp.ne.s32.totalorder %s107, %s109
    %p113 = scmp.eq.s32.totalorder %s10, 0
    %p114 = por %p112, %p113
    %p115 = scmp.ne.s32.totalorder %s107, %s109
    %p116 = scmp.eq.s32.totalorder %s15, 1
    %p117 = por %p115, %p116
    %p118 = scmp.ne.s32.totalorder %s109, %s110
    %p119 = scmp.eq.s32.totalorder %s15, 0
    %p120 = por %p118, %p119
    %p121 = scmp.ne.s32.totalorder %s109, %s110
    %p122 = scmp.eq.s32.totalorder %s16, 1
    %p123 = por %p121, %p122
    %p125 = scmp.ne.s32.totalorder %s110, %s124
    %p126 = scmp.eq.s32.totalorder %s16, 0
    %p127 = por %p125, %p126
    %s128 = ssub.s32 %s17, %s29
    %s129 = ssub.s32 %s18, %s25
    %s130 = sor.u32 %s128, %s129
    %p131 = scmp.eq.s32.totalorder %s130, 0
    %s133 = sadd.s32 %s132, 1
    %s134 = scalar_select %p131, %s132, %s133
    %p137 = pneg %p131
    %p138 = scmp.eq.s32.totalorder %s10, 1
    %p139 = por %p137, %p138
    %p140 = scmp.ne.s32.totalorder %s132, %s135
    %p141 = scmp.eq.s32.totalorder %s10, 0
    %p142 = por %p140, %p141
    %p143 = scmp.ne.s32.totalorder %s132, %s135
    %p144 = scmp.eq.s32.totalorder %s15, 1
    %p145 = por %p143, %p144
    %p146 = scmp.ne.s32.totalorder %s135, %s136
    %p147 = scmp.eq.s32.totalorder %s15, 0
    %p148 = por %p146, %p147
    %p149 = scmp.ne.s32.totalorder %s135, %s136
    %p150 = scmp.eq.s32.totalorder %s16, 1
    %p151 = por %p149, %p150
    %p153 = scmp.ne.s32.totalorder %s136, %s152
    %p154 = scmp.eq.s32.totalorder %s16, 0
    %p155 = por %p153, %p154
    %p156 = scmp.le.s32.totalorder 1, %s10
    %p157 = scmp.lt.s32.totalorder %s10, 3
    %p158 = pnand %p156, %p157
    %p159 = pneg %p158
    // Predicated region
    $region9: #{tpu_custom_call.1} parent=5 // pred_check
      _
    $region10: #{tpu_custom_call.1} parent=5 // pred_check_branch
      %161 = sbr.rel (%p158) target = $region12
    $region11: #{tpu_custom_call.1} parent=5 // pred_region
      %s162 = ssub.s32 %s10, 1
      // Predicated region
      $region13: #{tpu_custom_call.1} parent=11 // pred_check
        %p163 = pneg %p99
      $region14: #{tpu_custom_call.1} parent=11 // pred_check_branch
        %165 = sbr.rel (%p163) target = $region16
      $region15: #{tpu_custom_call.1} parent=11 // pred_region
        _
      $region16: #{tpu_custom_call.1} parent=11 // pred_fallthru
        _
      // Predicated region
      $region17: #{tpu_custom_call.1} parent=11 // pred_check
        %p166 = pneg %p120
      $region18: #{tpu_custom_call.1} parent=11 // pred_check_branch
        %168 = sbr.rel (%p166) target = $region20
      $region19: #{tpu_custom_call.1} parent=11 // pred_region
        _
      $region20: #{tpu_custom_call.1} parent=11 // pred_fallthru
        _
    $region12: #{tpu_custom_call.1} parent=5 // pred_fallthru
      _
    %p169 = scmp.lt.s32.totalorder %s10, 2
    // Predicated region
    $region21: #{tpu_custom_call.1} parent=5 // pred_check
      %p170 = pneg %p169
    $region22: #{tpu_custom_call.1} parent=5 // pred_check_branch
      %172 = sbr.rel (%p170) target = $region24
    $region23: #{tpu_custom_call.1} parent=5 // pred_region
      // Predicated region
      $region25: #{tpu_custom_call.1} parent=23 // pred_check
        %p173 = pneg %p44
      $region26: #{tpu_custom_call.1} parent=23 // pred_check_branch
        %175 = sbr.rel (%p173) target = $region28
      $region27: #{tpu_custom_call.1} parent=23 // pred_region
        %p176 = scmp.lt.s32.totalorder %s17, 1
        %s177 = scalar_select %p176, %s17, 1
        %p178 = scmp.lt.s32.totalorder %s18, 0
        %s179 = scalar_select %p178, %s18, 0
        %s180 = sadd.s32 %s179, %s177
        %s181 = smul.addr %s180, 4
        %s182 = scalar_lea.vmem %s0, %s181
      $region28: #{tpu_custom_call.1} parent=23 // pred_fallthru
        _
      // Predicated region
      $region29: #{tpu_custom_call.1} parent=23 // pred_check
        %p183 = pneg %p72
      $region30: #{tpu_custom_call.1} parent=23 // pred_check_branch
        %185 = sbr.rel (%p183) target = $region32
      $region31: #{tpu_custom_call.1} parent=23 // pred_region
        %p186 = scmp.lt.s32.totalorder %s17, 1
        %s187 = scalar_select %p186, %s17, 1
        %p188 = scmp.lt.s32.totalorder %s18, 0
        %s189 = scalar_select %p188, %s18, 0
        %s190 = sadd.s32 %s189, %s187
        %s191 = smul.addr %s190, 4
        %s192 = scalar_lea.vmem %s1, %s191
      $region32: #{tpu_custom_call.1} parent=23 // pred_fallthru
        _
    $region24: #{tpu_custom_call.1} parent=5 // pred_fallthru
      _
    %p193 = scmp.le.s32.totalorder 1, %s10
    %p194 = scmp.lt.s32.totalorder %s10, 3
    %p195 = pnand %p193, %p194
    %p196 = pneg %p195
    // Predicated region
    $region33: #{tpu_custom_call.1} parent=5 // pred_check
      _
    $region34: #{tpu_custom_call.1} parent=5 // pred_check_branch
      %198 = sbr.rel (%p195) target = $region36
    $region35: #{tpu_custom_call.1} parent=5 // pred_region
      %s199 = ssub.s32 %s10, 1
      %p200 = scmp.lt.s32.totalorder %s19, 1
      %s201 = scalar_select %p200, %s19, 1
      %p202 = scmp.lt.s32.totalorder %s20, 0
      %s203 = scalar_select %p202, %s20, 0
      %s204 = sadd.s32 %s203, %s201
      %s205 = smul.addr %s204, 4
      %s206 = scalar_lea.vmem %s0, %s205
      %p207 = pneg %p50
      %p208 = pneg %p47
      %p209 = scmp.lt.s32.totalorder %s19, 1
      %s210 = scalar_select %p209, %s19, 1
      %p211 = scmp.lt.s32.totalorder %s20, 0
      %s212 = scalar_select %p211, %s20, 0
      %s213 = sadd.s32 %s212, %s210
      %s214 = smul.addr %s213, 4
      %s215 = scalar_lea.vmem %s1, %s214
      %p216 = pneg %p78
      %p217 = pneg %p75
      %p218 = pneg %p99
      %p219 = pneg %p96
      %p220 = pneg %p120
      %p221 = pneg %p117
      %p222 = pneg %p148
      %p223 = pneg %p145
      %p224 = scmp.lt.s32.totalorder %s19, 1
      %s225 = scalar_select %p224, %s19, 1
      %p226 = scmp.lt.s32.totalorder %s20, 0
      %s227 = scalar_select %p226, %s20, 0
      %s228 = sadd.s32 %s227, %s225
      %s229 = smul.addr %s228, 8
      %s230 = scalar_lea.vmem %s4, %s229
      %p231 = scmp.lt.s32.totalorder %s19, 1
      %s232 = scalar_select %p231, %s19, 1
      %p233 = scmp.lt.s32.totalorder %s20, 0
      %s234 = scalar_select %p233, %s20, 0
      %s235 = sadd.s32 %s234, %s232
      %s236 = smul.addr %s235, 4
      %s237 = scalar_lea.vmem %s0, %s236
      %p238 = scmp.lt.s32.totalorder %s19, 1
      %s239 = scalar_select %p238, %s19, 1
      %p240 = scmp.lt.s32.totalorder %s20, 0
      %s241 = scalar_select %p240, %s20, 0
      %s242 = sadd.s32 %s241, %s239
      %s243 = smul.addr %s242, 4
      %s244 = scalar_lea.vmem %s1, %s243
      %p245 = scmp.lt.s32.totalorder %s19, 1
      %s246 = scalar_select %p245, %s19, 1
      %p247 = scmp.lt.s32.totalorder %s20, 0
      %s248 = scalar_select %p247, %s20, 0
      %s249 = sadd.s32 %s248, %s246
      %s250 = smul.addr %s249, 8
      %s251 = scalar_lea.vmem %s4, %s250
      %v252 = vld [vmem:[%s244] sm:$0xf]
      %vm253 = vcmask 125952
      %254 = vst.msk [vmem:[#allocation2 + $0x4] sm:$0xf] %vm253, %v252
      %v255 = vld [vmem:[%s237] sm:$0xf]
      %257 = vrot.lane.b32.xlu0 %v255, 124
      %v258 = vpop.permute.xlu0 %257
      %vm260 = vcmask 1044448
      %261 = vst.msk [vmem:[#allocation2] sm:$0xf] %vm260, %v258
      %v262 = vld [vmem:[%s2] sm:$0x3f]
      %v263 = vld [vmem:[#allocation2] sm:$0xff]
      %s264 = scalar_lea.vmem %s2, 8
      %v265 = vld [vmem:[%s264] sm:$0x3f]
      %267 = vst [vmem:[#allocation1] ss:$2 sm:$0xff] %v263
      %v268 = vld.sshfl [vmem:[#allocation1] sm:$0xff pattern:$0x75316420]
      %v269 = vld.sshfl [vmem:[#allocation1 + $0x8] sm:$0xff pattern:$0x75316420]
      %270 = vrot.lane.b32.xlu0 %v268, 2
      %v271 = vpop.permute.xlu0 %270
      %272 = vrot.lane.b32.xlu0 %v269, 2
      %v273 = vpop.permute.xlu0 %272
      %vm274 = vcmask 15360
      %v275 = vsel %vm274, %v271, %v273
      %vm276 = vcmask 31744
      %v278 = vsel %vm276, %v265, 0
      %vm280 = vcmask 1043456
      %v281 = vsel %vm280, %v275, 0
      %283 = vmatpush.msra.mxu0 0.0
      %284 = vmatpush.msra.mxu0 0.0
      %285 = vmatpush.msra.mxu0 0.0
      %286 = vmatpush.msra.mxu0 0.0
      %287 = vmatpush.msra.mxu0 0.0
      %288 = vmatpush.msra.mxu0 0.0
      %289 = vmatpush.msra.mxu0 0.0
      %290 = vmatpush.msra.mxu0 0.0
      %291 = vmatpush.msra.mxu0 0.0
      %292 = vmatpush.msra.mxu0 0.0
      %293 = vmatpush.msra.mxu0 0.0
      %294 = vmatpush.msra.mxu0 0.0
      %295 = vmatpush.msra.mxu0 0.0
      %296 = vmatpush.msra.mxu0 0.0
      %297 = vmatpush.msra.mxu0 0.0
      %298 = vmatpush.msra.mxu0 %v281
      %299 = vmatmul.f32.gmra.mxu0 %v278
      %v300 = vpop.f32.mrf.mxu0
      %v301 = vadd.f32 0.0, %v300
      %302 = vdwg.mxu0
      %303 = vst [vmem:[#allocation1] ss:$2 sm:$0xff] %v263
      %v304 = vld.sshfl [vmem:[#allocation1] sm:$0xff pattern:$0x75316420]
      %v305 = vld.sshfl [vmem:[#allocation1 + $0x8] sm:$0xff pattern:$0x75316420]
      %306 = vrot.lane.b32.xlu0 %v304, 4
      %v307 = vpop.permute.xlu0 %306
      %308 = vrot.lane.b32.xlu0 %v305, 4
      %v309 = vpop.permute.xlu0 %308
      %v310 = vsel %vm276, %v307, %v309
      %v312 = vsel %vm276, %v262, 0
      %v314 = vsel %vm280, %v310, 0
      %316 = vmatpush.msra.mxu0 0.0
      %317 = vmatpush.msra.mxu0 0.0
      %318 = vmatpush.msra.mxu0 0.0
      %319 = vmatpush.msra.mxu0 0.0
      %320 = vmatpush.msra.mxu0 0.0
      %321 = vmatpush.msra.mxu0 0.0
      %322 = vmatpush.msra.mxu0 0.0
      %323 = vmatpush.msra.mxu0 0.0
      %324 = vmatpush.msra.mxu0 0.0
      %325 = vmatpush.msra.mxu0 0.0
      %326 = vmatpush.msra.mxu0 0.0
      %327 = vmatpush.msra.mxu0 0.0
      %328 = vmatpush.msra.mxu0 0.0
      %329 = vmatpush.msra.mxu0 0.0
      %330 = vmatpush.msra.mxu0 0.0
      %331 = vmatpush.msra.mxu0 %v314
      %332 = vmatmul.f32.gmra.mxu0 %v312
      %v333 = vpop.f32.mrf.mxu0
      %v334 = vadd.f32 %v301, %v333
      %335 = vdwg.mxu0
      %s336 = scalar_lea.vmem %s2, 16
      %v337 = vld [vmem:[%s336] sm:$0x3f]
      %v338 = vld [vmem:[#allocation2 + $0x4] sm:$0xf]
      %v340 = vsel %vm276, %v337, 0
      %v343 = vsel %vm280, %v338, 0
      %345 = vmatpush.msra.mxu0 0.0
      %346 = vmatpush.msra.mxu0 0.0
      %347 = vmatpush.msra.mxu0 0.0
      %348 = vmatpush.msra.mxu0 0.0
      %349 = vmatpush.msra.mxu0 0.0
      %350 = vmatpush.msra.mxu0 0.0
      %351 = vmatpush.msra.mxu0 0.0
      %352 = vmatpush.msra.mxu0 0.0
      %353 = vmatpush.msra.mxu0 0.0
      %354 = vmatpush.msra.mxu0 0.0
      %355 = vmatpush.msra.mxu0 0.0
      %356 = vmatpush.msra.mxu0 0.0
      %357 = vmatpush.msra.mxu0 0.0
      %358 = vmatpush.msra.mxu0 0.0
      %359 = vmatpush.msra.mxu0 0.0
      %360 = vmatpush.msra.mxu0 %v343
      %361 = vmatmul.f32.gmra.mxu0 %v340
      %v362 = vpop.f32.mrf.mxu0
      %v363 = vadd.f32 0.0, %v362
      %364 = vdwg.mxu0
      %v365 = vadd.f32 %v334, %v363
      %v366 = vld [vmem:[%s3] sm:$0x3f]
      %368 = vset.pattern.permute.xlu0 0
      %369 = vperm.xlu0 %368, %v366
      %v370 = vpop.permute.xlu0 %369
      %v372 = vadd.f32 %v365, %v370
      %vm373 = vcmask 128000
      %374 = vst.msk [vmem:[%s251] sm:$0x3f] %vm373, %v372
      %p375 = scmp.lt.s32.totalorder %s19, 1
      %s376 = scalar_select %p375, %s19, 1
      %p377 = scmp.lt.s32.totalorder %s20, 0
      %s378 = scalar_select %p377, %s20, 0
      %s379 = sadd.s32 %s378, %s376
      %s380 = smul.addr %s379, 8
      %s381 = scalar_lea.vmem %s4, %s380
      // Predicated region
      $region37: #{tpu_custom_call.1} parent=35 // pred_check
        %p382 = pneg %p145
      $region38: #{tpu_custom_call.1} parent=35 // pred_check_branch
        %384 = sbr.rel (%p382) target = $region40
      $region39: #{tpu_custom_call.1} parent=35 // pred_region
        _
      $region40: #{tpu_custom_call.1} parent=35 // pred_fallthru
        _
    $region36: #{tpu_custom_call.1} parent=5 // pred_fallthru
      _
    %p385 = scmp.le.s32.totalorder 2, %s10
    // Predicated region
    $region41: #{tpu_custom_call.1} parent=5 // pred_check
      %p386 = pneg %p385
    $region42: #{tpu_custom_call.1} parent=5 // pred_check_branch
      %388 = sbr.rel (%p386) target = $region44
    $region43: #{tpu_custom_call.1} parent=5 // pred_region
      %s389 = ssub.s32 %s10, 2
      // Predicated region
      $region45: #{tpu_custom_call.1} parent=43 // pred_check
        %p390 = pneg %p151
      $region46: #{tpu_custom_call.1} parent=43 // pred_check_branch
        %392 = sbr.rel (%p390) target = $region48
      $region47: #{tpu_custom_call.1} parent=43 // pred_region
        %p393 = scmp.lt.s32.totalorder %s21, 1
        %s394 = scalar_select %p393, %s21, 1
        %p395 = scmp.lt.s32.totalorder %s22, 0
        %s396 = scalar_select %p395, %s22, 0
        %s397 = sadd.s32 %s396, %s394
        %s398 = smul.addr %s397, 8
        %s399 = scalar_lea.vmem %s4, %s398
      $region48: #{tpu_custom_call.1} parent=43 // pred_fallthru
        _
    $region44: #{tpu_custom_call.1} parent=5 // pred_fallthru
      _
  $region6: #{tpu_custom_call.1} parent=0 // loop_footer
    %s14 = sadd.s32 1, %s10
  $region7: #{tpu_custom_call.1} parent=0 // loop_footer_branch
    %9 = sbr.rel target = $region3
  $region8: #{tpu_custom_call.1} parent=0 // loop_exit
    _

</llo_original>
